<compile_context>
chip_gen: v5e
topology: v5e:2x2
jax: 0.10.0
libtpu: 0.0.40
codegen_flags: <defaults>
</compile_context>

<pallas_src>
import numpy as np
import jax
import jax.numpy as jnp
from jax.experimental import pallas as pl
from jax.experimental.pallas import tpu as pltpu


# Matmul precision for the two resize contractions.  None == TPU default MXU
# path (validated against the in-script reference at these tolerances).  Set
# to jax.lax.Precision.HIGHEST if bit-level parity with torchvision f32 is
# required at large output sizes.
_MM_PRECISION = None

_LANE = 128                                  # f32 lane width
_VMEM_BUDGET = 40 * 1024 * 1024              # v7x-safe working budget (64 MiB phys)


def _round_up(x: int, m: int) -> int:
    return ((x + m - 1) // m) * m


# ----------------------------------------------------------------------------
# Glue: antialiased bilinear interpolation matrix (PIL / torchvision
# antialias=True algorithm, triangle filter with support scaled by the ratio).
# ----------------------------------------------------------------------------
def antialias_bilinear_matrix(in_size: int, out_size: int) -> np.ndarray:
    scale = in_size / out_size
    filterscale = max(scale, 1.0)            # widen filter only when downscaling
    support = 1.0 * filterscale              # bilinear base support = 1.0
    w = np.zeros((out_size, in_size), dtype=np.float32)
    for j in range(out_size):
        center = (j + 0.5) * scale
        xmin = max(0, int(center - support + 0.5))
        xmax = min(in_size, int(center + support + 0.5))
        xs = np.arange(xmin, xmax, dtype=np.float64)
        k = np.maximum(0.0, 1.0 - np.abs((xs + 0.5 - center) / filterscale))
        k = k / k.sum()
        w[j, xmin:xmax] = k.astype(np.float32)
    return w


# ----------------------------------------------------------------------------
# VMEM-budget-aware choice of B = planes per grid step.
# ----------------------------------------------------------------------------
def _plane_vmem_bytes(b, h_in, w_in, h_out, w_out_pad):
    inp = 2 * b * h_in * w_in * 4                    # double-buffered input tile
    out = 2 * b * h_out * w_out_pad * 4              # double-buffered output tile
    scr = h_in * b * w_out_pad * 4                   # pass-A scratch
    nrm = 2 * 2 * b * w_out_pad * 4                  # stacked mean / inv_std lanes
    wts = 2 * (w_in * w_out_pad + h_out * h_in) * 4  # resize matrices (conservative 2x)
    return inp + out + scr + nrm + wts


def _choose_plane_block(nc, h_in, w_in, h_out, w_out_pad, budget_bytes):
    divs = [d for d in range(1, nc + 1) if nc % d == 0]
    fit = [d for d in divs
           if _plane_vmem_bytes(d, h_in, w_in, h_out, w_out_pad) <= budget_bytes]
    if not fit:
        # TODO(synk): single plane exceeds the budget -> needs the reduction-
        # chunk grid axis; fall back to B=1 and let vmem_limit_bytes stretch.
        fit = [1]

    def score(b):
        g = nc // b
        return ((g >= 4) + (g % 2 == 0),          # pipeline depth + even split (v7x 2 TCs)
                (b * w_out_pad) % 256 == 0,       # 256-lane MXU edge (v6e/v7x)
                b)                                # amortize ~0.35us per-step overhead

    return max(fit, key=score)


# ----------------------------------------------------------------------------
# Pallas kernel: B planes per grid step.
#   pass A : per-plane (H_in, W_in) @ (W_in, W_out_pad) written straight into
#            128-aligned lane slices of the scratch (no relayout temp).
#   pass B : one lane-dense (H_out, H_in) @ (H_in, B*W_out_pad) GEMM.
#   fused (x - mean) * inv_std, then per-plane lane-dense stores -> NCHW.
# ----------------------------------------------------------------------------
def _make_kernel(B, H_in, W_in, H_out, W_out_pad):
    Wp = W_out_pad

    def kernel(x_ref, wwt_ref, wh_ref, norm_ref, o_ref, t_ref):
        # x_ref:    (B, H_in, W_in)       input planes of this step
        # wwt_ref:  (W_in, W_out_pad)     column-resize weights (transposed, padded)
        # wh_ref:   (H_out, H_in)         row-resize weights
        # norm_ref: (1, 2, B*W_out_pad)   stacked [mean; inv_std] lane vectors
        # o_ref:    (B, H_out, W_out_pad) NCHW output planes (lane padded)
        # t_ref:    (H_in, B*W_out_pad)   VMEM scratch (lane-folded intermediate)
        wwt = wwt_ref[...]

        # Pass A: W contraction per plane, stored directly into aligned lane
        # slices of the scratch (static offsets, multiples of 128).
        for b in range(B):
            t_ref[:, b * Wp:(b + 1) * Wp] = jnp.dot(
                x_ref[b], wwt,
                preferred_element_type=jnp.float32, precision=_MM_PRECISION)

        # Pass B: H contraction for all planes in one lane-dense GEMM.
        y = jnp.dot(wh_ref[...], t_ref[...],
                    preferred_element_type=jnp.float32, precision=_MM_PRECISION)

        # Fused per-channel normalization (lane-broadcast constants).
        nrm = norm_ref[0]                       # (2, B*Wp)
        z = (y - nrm[0:1, :]) * nrm[1:2, :]     # (H_out, B*Wp)

        # Per-plane lane-dense stores -> NCHW layout directly (no wrapper
        # transpose).  Wp is a multiple of 128 so every store is unmasked.
        for b in range(B):
            o_ref[b] = z[:, b * Wp:(b + 1) * Wp]

    return kernel


def preprocessing_model(x_nchw, resize_hw, mean, std):
    """x_nchw: f32 (N, C, H_in, W_in). Returns f32 (N, C, H_out, W_out)."""
    N, C, H_in, W_in = x_nchw.shape
    H_out, W_out = resize_hw
    assert len(mean) == C and len(std) == C

    NC = N * C
    W_out_pad = _round_up(W_out, _LANE)          # lane-dense output stores
    B = _choose_plane_block(NC, H_in, W_in, H_out, W_out_pad, _VMEM_BUDGET)
    G = NC // B                                  # grid length ("parallel" axis)

    # Interpolation matrices (constants, built in NumPy).  Zero columns pad
    # wwt to W_out_pad so padded lanes compute harmless zeros.
    wh = jnp.asarray(antialias_bilinear_matrix(H_in, H_out))           # (H_out, H_in)
    ww = antialias_bilinear_matrix(W_in, W_out)                        # (W_out, W_in)
    wwt_np = np.zeros((W_in, W_out_pad), np.float32)
    wwt_np[:, :W_out] = ww.T
    wwt = jnp.asarray(wwt_np)                                          # (W_in, W_out_pad)

    # Stacked per-plane normalization constants along the lane axis.
    # Lane segment b of grid step i belongs to plane p = i*B + b, channel p % C.
    mean_np = np.asarray(mean, np.float32)
    istd_np = 1.0 / np.asarray(std, np.float32)
    norm_np = np.zeros((NC, 2, W_out_pad), np.float32)
    for p in range(NC):
        c = p % C
        norm_np[p, 0, :W_out] = mean_np[c]
        norm_np[p, 1, :W_out] = istd_np[c]
        norm_np[p, 1, W_out:] = 1.0              # keep padded lanes finite
    norm = jnp.asarray(
        norm_np.reshape(G, B, 2, W_out_pad)
               .transpose(0, 2, 1, 3)
               .reshape(G, 2, B * W_out_pad))

    x_planes = x_nchw.astype(jnp.float32).reshape(NC, H_in, W_in)

    needed = _plane_vmem_bytes(B, H_in, W_in, H_out, W_out_pad)
    vmem_limit = int(min(max(needed * 1.3, 32 * 1024 * 1024), 48 * 1024 * 1024))

    kernel = _make_kernel(B, H_in, W_in, H_out, W_out_pad)

    out_pad = pl.pallas_call(
        kernel,
        out_shape=jax.ShapeDtypeStruct((NC, H_out, W_out_pad), jnp.float32),
        grid=(G,),
        in_specs=[
            # B input planes per step.
            pl.BlockSpec((B, H_in, W_in), lambda i: (i, 0, 0)),
            # Invariant weights (constant index_map -> no re-DMA across steps).
            pl.BlockSpec((W_in, W_out_pad), lambda i: (0, 0)),
            pl.BlockSpec((H_out, H_in), lambda i: (0, 0)),
            # Stacked per-step normalization lane vectors (single small DMA).
            pl.BlockSpec((1, 2, B * W_out_pad), lambda i: (i, 0, 0)),
        ],
        out_specs=pl.BlockSpec((B, H_out, W_out_pad), lambda i: (i, 0, 0)),
        scratch_shapes=[pltpu.VMEM((H_in, B * W_out_pad), jnp.float32)],
        compiler_params=pltpu.CompilerParams(
            dimension_semantics=("parallel",),
            vmem_limit_bytes=vmem_limit),
    )(x_planes, wwt, wh, norm)

    # Output is already NCHW-ordered; only drop the lane padding.
    out = out_pad.reshape(N, C, H_out, W_out_pad)
    if W_out_pad != W_out:
        out = out[..., :W_out]
    return out


if __name__ == "__main__":
    # Small, image-like shapes implied by the forward pass (ImageNet-style C=3).
    N, C, H_in, W_in = 2, 3, 16, 16
    resize_hw = (8, 8)
    mean = [0.485, 0.456, 0.406]
    std = [0.229, 0.224, 0.225]

    key = jax.random.PRNGKey(0)
    x = jax.random.uniform(key, (N, C, H_in, W_in), dtype=jnp.float32)

    out = preprocessing_model(x, resize_hw, mean, std)
    out = jax.block_until_ready(out)

    # Pure-JAX reference (same interpolation matrices, same matmul precision).
    wh = jnp.asarray(antialias_bilinear_matrix(H_in, resize_hw[0]))
    ww = jnp.asarray(antialias_bilinear_matrix(W_in, resize_hw[1]))
    ref = jnp.einsum("oh,nchw,pw->ncop", wh, x, ww, precision=_MM_PRECISION)
    ref = (ref - jnp.asarray(mean, jnp.float32).reshape(1, C, 1, 1)) \
          / jnp.asarray(std, jnp.float32).reshape(1, C, 1, 1)

    assert out.shape == (N, C, resize_hw[0], resize_hw[1])
    np.testing.assert_allclose(np.asarray(out), np.asarray(ref),
                               atol=1e-4, rtol=1e-4)
    print("KERNEL_OK")
</pallas_src>

<mosaic_0001>
module attributes {stable_mosaic.version = 11 : i64} {
  func.func @kernel(%arg0: i32, %arg1: memref<1x16x16xf32, #tpu.memory_space<vmem>>, %arg2: memref<16x128xf32, #tpu.memory_space<vmem>>, %arg3: memref<8x16xf32, #tpu.memory_space<vmem>>, %arg4: memref<1x2x128xf32, #tpu.memory_space<vmem>>, %arg5: memref<1x8x128xf32, #tpu.memory_space<vmem>>, %arg6: memref<16x128xf32, #tpu.memory_space<vmem>>) attributes {dimension_semantics = [#tpu.dimension_semantics<parallel>], iteration_bounds = array<i64: 6>, scalar_prefetch = 0 : i64, scratch_operands = 1 : i64, tpu.core_type = #tpu.core_type<tc>, window_params = [{transform_indices = @transform_0, window_bounds = array<i64: 1, 16, 16>}, {pipeline_mode = #tpu.pipeline_mode<synchronous>, transform_indices = @transform_1, window_bounds = array<i64: 16, 128>}, {pipeline_mode = #tpu.pipeline_mode<synchronous>, transform_indices = @transform_2, window_bounds = array<i64: 8, 16>}, {transform_indices = @transform_3, window_bounds = array<i64: 1, 2, 128>}, {transform_indices = @transform_4, window_bounds = array<i64: 1, 8, 128>}]} {
    %c0 = arith.constant 0 : index
    %c0_0 = arith.constant 0 : index
    %0 = vector.load %arg2[%c0, %c0_0] : memref<16x128xf32, #tpu.memory_space<vmem>>, vector<16x128xf32>
    %c0_1 = arith.constant 0 : index
    %c0_2 = arith.constant 0 : index
    %c0_3 = arith.constant 0 : index
    %1 = vector.load %arg1[%c0_1, %c0_2, %c0_3] : memref<1x16x16xf32, #tpu.memory_space<vmem>>, vector<1x16x16xf32>
    %2 = vector.shape_cast %1 : vector<1x16x16xf32> to vector<16x16xf32>
    %cst = arith.constant dense<0.000000e+00> : vector<16x128xf32>
    %3 = tpu.matmul %2, %0, %cst {dimension_numbers = #tpu.dot_dimension_numbers<[1], [0], [0], [1], [0, 0, 1, 1], [], []>} : vector<16x16xf32>, vector<16x128xf32>, vector<16x128xf32> -> vector<16x128xf32>
    %c0_4 = arith.constant 0 : index
    %c0_5 = arith.constant 0 : index
    %4 = vector.load %arg6[%c0_4, %c0_5] : memref<16x128xf32, #tpu.memory_space<vmem>>, vector<16x128xf32>
    tpu.vector_store %arg6[%c0_4, %c0_5], %3 {strides = array<i32>} : memref<16x128xf32, #tpu.memory_space<vmem>>, vector<16x128xf32>,
    %c0_6 = arith.constant 0 : index
    %c0_7 = arith.constant 0 : index
    %5 = vector.load %arg3[%c0_6, %c0_7] : memref<8x16xf32, #tpu.memory_space<vmem>>, vector<8x16xf32>
    %c0_8 = arith.constant 0 : index
    %c0_9 = arith.constant 0 : index
    %6 = vector.load %arg6[%c0_8, %c0_9] : memref<16x128xf32, #tpu.memory_space<vmem>>, vector<16x128xf32>
    %cst_10 = arith.constant dense<0.000000e+00> : vector<8x128xf32>
    %7 = tpu.matmul %5, %6, %cst_10 {dimension_numbers = #tpu.dot_dimension_numbers<[1], [0], [0], [1], [0, 0, 1, 1], [], []>} : vector<8x16xf32>, vector<16x128xf32>, vector<8x128xf32> -> vector<8x128xf32>
    %c0_11 = arith.constant 0 : index
    %c0_12 = arith.constant 0 : index
    %c0_13 = arith.constant 0 : index
    %8 = vector.load %arg4[%c0_11, %c0_12, %c0_13] : memref<1x2x128xf32, #tpu.memory_space<vmem>>, vector<1x2x128xf32>
    %9 = vector.shape_cast %8 : vector<1x2x128xf32> to vector<2x128xf32>
    %10 = vector.extract_strided_slice %9 {offsets = [0, 0], sizes = [1, 128], strides = [1, 1]} : vector<2x128xf32> to vector<1x128xf32>
    %11 = vector.broadcast %10 : vector<1x128xf32> to vector<8x128xf32>
    %12 = arith.subf %7, %11 : vector<8x128xf32>
    %13 = vector.extract_strided_slice %9 {offsets = [1, 0], sizes = [1, 128], strides = [1, 1]} : vector<2x128xf32> to vector<1x128xf32>
    %14 = vector.broadcast %13 : vector<1x128xf32> to vector<8x128xf32>
    %15 = arith.mulf %12, %14 : vector<8x128xf32>
    %c0_14 = arith.constant 0 : index
    %c0_15 = arith.constant 0 : index
    %c0_16 = arith.constant 0 : index
    %16 = vector.load %arg5[%c0_14, %c0_15, %c0_16] : memref<1x8x128xf32, #tpu.memory_space<vmem>>, vector<1x8x128xf32>
    %17 = vector.shape_cast %16 : vector<1x8x128xf32> to vector<8x128xf32>
    %18 = vector.shape_cast %15 : vector<8x128xf32> to vector<1x8x128xf32>
    tpu.vector_store %arg5[%c0_14, %c0_15, %c0_16], %18 {strides = array<i32>} : memref<1x8x128xf32, #tpu.memory_space<vmem>>, vector<1x8x128xf32>,
    return
  }
  func.func @transform_0(%arg0: i32) -> (i32, i32, i32) {
    %c0_i32 = arith.constant 0 : i32
    %c0_i32_0 = arith.constant 0 : i32
    %c0_i32_1 = arith.constant 0 : i32
    return %arg0, %c0_i32, %c0_i32_0 : i32, i32, i32
  }
  func.func @transform_1(%arg0: i32) -> (i32, i32) {
    %c0_i32 = arith.constant 0 : i32
    %c0_i32_0 = arith.constant 0 : i32
    %c0_i32_1 = arith.constant 0 : i32
    return %c0_i32, %c0_i32_0 : i32, i32
  }
  func.func @transform_2(%arg0: i32) -> (i32, i32) {
    %c0_i32 = arith.constant 0 : i32
    %c0_i32_0 = arith.constant 0 : i32
    %c0_i32_1 = arith.constant 0 : i32
    return %c0_i32, %c0_i32_0 : i32, i32
  }
  func.func @transform_3(%arg0: i32) -> (i32, i32, i32) {
    %c0_i32 = arith.constant 0 : i32
    %c0_i32_0 = arith.constant 0 : i32
    %c0_i32_1 = arith.constant 0 : i32
    return %arg0, %c0_i32, %c0_i32_0 : i32, i32, i32
  }
  func.func @transform_4(%arg0: i32) -> (i32, i32, i32) {
    %c0_i32 = arith.constant 0 : i32
    %c0_i32_0 = arith.constant 0 : i32
    %c0_i32_1 = arith.constant 0 : i32
    return %arg0, %c0_i32, %c0_i32_0 : i32, i32, i32
  }
}

</mosaic_0001>

<llo_original>
// kernel: tpu_custom_call.1
$region0: #{tpu_custom_call.1}
  #allocation0 [shape = 'u32[]', space=smem, size = 0x4, offset = 0x4, fixed_abs, tag = 'smem constant byte address 0x4 - core index']
  #allocation1 [shape = 'u32[72,128]{1,0:T(1,128)}', space=vmem, size = 0x9000, scoped, tag = 'internal scratch']
  #allocation2 [shape = 'f32[16,128]{1,0:T(8,128)}', space=vmem, size = 0x2000, scoped, tag = 'scratch operand']
  %s0 = inlined_call_operand.hbm [shape: f32[6,16,16], index: 0, kind: input, shape index: {}]
  %s1 = inlined_call_operand.hbm [shape: f32[16,128], index: 1, kind: input, shape index: {}]
  %s2 = inlined_call_operand.hbm [shape: f32[8,16], index: 2, kind: input, shape index: {}]
  %s3 = inlined_call_operand.hbm [shape: f32[6,2,128], index: 3, kind: input, shape index: {}]
  %s4 = inlined_call_operand.hbm [shape: f32[6,8,128], index: 4, kind: output, shape index: {}]
  %s5 = sld [smem:[#allocation0]]
  $region65: #{tpu_custom_call.1} parent=0
    _
  %s7 = ssub.s32 1, %s5
  %s8 = scalar_select 0, %s7, %s5
  $region1: #{tpu_custom_call.1} parent=0
    #allocation3 [shape = 'u8[16384]{0}', space=vmem, size = 0x4000, scoped, tag = 'input window, operand 0']
    #allocation4 [shape = 's32[2]{0}', space=sflag, size = 0x8, scoped, tag = 'scoped memory for tpu_custom_call.1']
    #allocation5 [shape = 's32[2]{0}', space=sflag, size = 0x8, scoped, tag = 'scoped memory for tpu_custom_call.1']
    #allocation6 [shape = 'u8[8192]{0}', space=vmem, size = 0x2000, scoped, tag = 'input window, operand 1, single buffered']
    #allocation7 [shape = 's32[1]{0}', space=sflag, size = 0x4, scoped, tag = 'scoped memory for tpu_custom_call.1']
    #allocation8 [shape = 'u8[4096]{0}', space=vmem, size = 0x1000, scoped, tag = 'input window, operand 2, single buffered']
    #allocation9 [shape = 'u8[2048]{0}', space=vmem, size = 0x800, scoped, tag = 'input window, operand 3']
    #allocation10 [shape = 's32[2]{0}', space=sflag, size = 0x8, scoped, tag = 'scoped memory for tpu_custom_call.1']
    #allocation11 [shape = 'u8[8192]{0}', space=vmem, size = 0x2000, scoped, tag = 'output window, operand 0']
    %9 = vsyncpa [#allocation4], 0
    %s10 = scalar_lea.sflag [#allocation4], 1
    %11 = vsyncpa %s10, 0
    %12 = vsyncpa [#allocation7], 0
    %13 = vsyncpa [#allocation10], 0
    %s14 = scalar_lea.sflag [#allocation10], 1
    %15 = vsyncpa %s14, 0
    %16 = vsyncpa [#allocation5], 0
    %s17 = scalar_lea.sflag [#allocation5], 1
    %18 = vsyncpa %s17, 0
    loop: start=0, step=1, limit=8
    $region2: #{tpu_custom_call.1} parent=1 // loop_pre_header
      _
    $region3: #{tpu_custom_call.1} parent=1 // loop_header
      %s20 = sphi 0, %s24
      %p21 = scmp.ge.s32.totalorder %s20, 8
      %s30 = sphi 0, %s32
      %s33 = sphi 0, %s30
      %s34 = sphi 0, %s33
      %s50 = sphi 0, %s34
      %s54 = sphi 0, %s54
      %s56 = sphi 0, %s54
      %s57 = sphi 0, %s56
      %s71 = sphi 0, %s57
      %s75 = sphi 0, %s75
      %s77 = sphi 0, %s75
      %s78 = sphi 0, %s77
      %s92 = sphi 0, %s78
      %s98 = sphi 0, %s100
      %s101 = sphi 0, %s98
      %s102 = sphi 0, %s101
      %s118 = sphi 0, %s102
      %s124 = sphi 0, %s126
      %s127 = sphi 0, %s124
      %s128 = sphi 0, %s127
      %s144 = sphi 0, %s128
    $region4: #{tpu_custom_call.1} parent=1 // loop_header_branch
      %23 = sbr.rel (%p21) target = $region8
    $region5: #{tpu_custom_call.1} parent=1 // loop_body
      %s25 = ssub.s32 %s20, 1
      %s26 = ssub.s32 %s20, 2
      %s27 = sadd.s32 %s20, 1
      %s28 = ssub.s32 %s20, %s27
      %p29 = scmp.eq.s32.totalorder %s28, 0
      %s31 = sadd.s32 %s30, 1
      %s32 = scalar_select %p29, %s30, %s31
      %p35 = pneg %p29
      %p36 = scmp.eq.s32.totalorder %s20, 5
      %p37 = por %p35, %p36
      %p38 = scmp.ne.s32.totalorder %s30, %s33
      %p39 = scmp.eq.s32.totalorder %s20, 0
      %p40 = por %p38, %p39
      %p41 = scmp.ne.s32.totalorder %s30, %s33
      %p42 = scmp.eq.s32.totalorder %s25, 5
      %p43 = por %p41, %p42
      %p44 = scmp.ne.s32.totalorder %s33, %s34
      %p45 = scmp.eq.s32.totalorder %s25, 0
      %p46 = por %p44, %p45
      %p47 = scmp.ne.s32.totalorder %s33, %s34
      %p48 = scmp.eq.s32.totalorder %s26, 5
      %p49 = por %p47, %p48
      %p51 = scmp.ne.s32.totalorder %s34, %s50
      %p52 = scmp.eq.s32.totalorder %s26, 0
      %p53 = por %p51, %p52
      %s55 = sadd.s32 %s54, 1
      %p58 = scmp.eq.s32.totalorder %s20, 5
      %p59 = scmp.ne.s32.totalorder %s54, %s56
      %p60 = scmp.eq.s32.totalorder %s20, 0
      %p61 = por %p59, %p60
      %p62 = scmp.ne.s32.totalorder %s54, %s56
      %p63 = scmp.eq.s32.totalorder %s25, 5
      %p64 = por %p62, %p63
      %p65 = scmp.ne.s32.totalorder %s56, %s57
      %p66 = scmp.eq.s32.totalorder %s25, 0
      %p67 = por %p65, %p66
      %p68 = scmp.ne.s32.totalorder %s56, %s57
      %p69 = scmp.eq.s32.totalorder %s26, 5
      %p70 = por %p68, %p69
      %p72 = scmp.ne.s32.totalorder %s57, %s71
      %p73 = scmp.eq.s32.totalorder %s26, 0
      %p74 = por %p72, %p73
      %s76 = sadd.s32 %s75, 1
      %p79 = scmp.eq.s32.totalorder %s20, 5
      %p80 = scmp.ne.s32.totalorder %s75, %s77
      %p81 = scmp.eq.s32.totalorder %s20, 0
      %p82 = por %p80, %p81
      %p83 = scmp.ne.s32.totalorder %s75, %s77
      %p84 = scmp.eq.s32.totalorder %s25, 5
      %p85 = por %p83, %p84
      %p86 = scmp.ne.s32.totalorder %s77, %s78
      %p87 = scmp.eq.s32.totalorder %s25, 0
      %p88 = por %p86, %p87
      %p89 = scmp.ne.s32.totalorder %s77, %s78
      %p90 = scmp.eq.s32.totalorder %s26, 5
      %p91 = por %p89, %p90
      %p93 = scmp.ne.s32.totalorder %s78, %s92
      %p94 = scmp.eq.s32.totalorder %s26, 0
      %p95 = por %p93, %p94
      %s96 = ssub.s32 %s20, %s27
      %p97 = scmp.eq.s32.totalorder %s96, 0
      %s99 = sadd.s32 %s98, 1
      %s100 = scalar_select %p97, %s98, %s99
      %p103 = pneg %p97
      %p104 = scmp.eq.s32.totalorder %s20, 5
      %p105 = por %p103, %p104
      %p106 = scmp.ne.s32.totalorder %s98, %s101
      %p107 = scmp.eq.s32.totalorder %s20, 0
      %p108 = por %p106, %p107
      %p109 = scmp.ne.s32.totalorder %s98, %s101
      %p110 = scmp.eq.s32.totalorder %s25, 5
      %p111 = por %p109, %p110
      %p112 = scmp.ne.s32.totalorder %s101, %s102
      %p113 = scmp.eq.s32.totalorder %s25, 0
      %p114 = por %p112, %p113
      %p115 = scmp.ne.s32.totalorder %s101, %s102
      %p116 = scmp.eq.s32.totalorder %s26, 5
      %p117 = por %p115, %p116
      %p119 = scmp.ne.s32.totalorder %s102, %s118
      %p120 = scmp.eq.s32.totalorder %s26, 0
      %p121 = por %p119, %p120
      %s122 = ssub.s32 %s20, %s27
      %p123 = scmp.eq.s32.totalorder %s122, 0
      %s125 = sadd.s32 %s124, 1
      %s126 = scalar_select %p123, %s124, %s125
      %p129 = pneg %p123
      %p130 = scmp.eq.s32.totalorder %s20, 5
      %p131 = por %p129, %p130
      %p132 = scmp.ne.s32.totalorder %s124, %s127
      %p133 = scmp.eq.s32.totalorder %s20, 0
      %p134 = por %p132, %p133
      %p135 = scmp.ne.s32.totalorder %s124, %s127
      %p136 = scmp.eq.s32.totalorder %s25, 5
      %p137 = por %p135, %p136
      %p138 = scmp.ne.s32.totalorder %s127, %s128
      %p139 = scmp.eq.s32.totalorder %s25, 0
      %p140 = por %p138, %p139
      %p141 = scmp.ne.s32.totalorder %s127, %s128
      %p142 = scmp.eq.s32.totalorder %s26, 5
      %p143 = por %p141, %p142
      %p145 = scmp.ne.s32.totalorder %s128, %s144
      %p146 = scmp.eq.s32.totalorder %s26, 0
      %p147 = por %p145, %p146
      %p148 = scmp.le.s32.totalorder 1, %s20
      %p149 = scmp.lt.s32.totalorder %s20, 7
      %p150 = pnand %p148, %p149
      %p151 = pneg %p150
      // Predicated region
      $region9: #{tpu_custom_call.1} parent=5 // pred_check
        _
      $region10: #{tpu_custom_call.1} parent=5 // pred_check_branch
        %153 = sbr.rel (%p150) target = $region12
      $region11: #{tpu_custom_call.1} parent=5 // pred_region
        %s154 = ssub.s32 %s20, 1
        // Predicated region
        $region13: #{tpu_custom_call.1} parent=11 // pred_check
          %p155 = pneg %p67
        $region14: #{tpu_custom_call.1} parent=11 // pred_check_branch
          %157 = sbr.rel (%p155) target = $region16
        $region15: #{tpu_custom_call.1} parent=11 // pred_region
          %159 = vsyncadd [#allocation7], 0
          %s160 = sshll.u32 %s1, 4
          %s161 = int_to_ptr.hbm [resolvable:$true] %s160
          %s162 = sshll.u32 [#allocation6], 4
          %s163 = int_to_ptr.vmem [resolvable:$true] %s162
          %168 = dma.hbm_to_vmem [thread:$0]  %s161, 256, %s163, [#allocation7], 128, 128, 8
        $region16: #{tpu_custom_call.1} parent=11 // pred_fallthru
          _
        // Predicated region
        $region17: #{tpu_custom_call.1} parent=11 // pred_check
          %p169 = pneg %p88
        $region18: #{tpu_custom_call.1} parent=11 // pred_check_branch
          %171 = sbr.rel (%p169) target = $region20
        $region19: #{tpu_custom_call.1} parent=11 // pred_region
          %173 = vsyncadd [#allocation7], 0
          %s175 = sshll.u32 %s2, 4
          %s176 = int_to_ptr.hbm [resolvable:$true] %s175
          %s177 = sshll.u32 [#allocation8], 4
          %s178 = int_to_ptr.vmem [resolvable:$true] %s177
          %180 = dma.hbm_to_vmem [thread:$0]  %s176, 128, %s178, [#allocation7]
        $region20: #{tpu_custom_call.1} parent=11 // pred_fallthru
          _
      $region12: #{tpu_custom_call.1} parent=5 // pred_fallthru
        _
      %p181 = scmp.lt.s32.totalorder %s20, 6
      // Predicated region
      $region21: #{tpu_custom_call.1} parent=5 // pred_check
        %p182 = pneg %p181
      $region22: #{tpu_custom_call.1} parent=5 // pred_check_branch
        %184 = sbr.rel (%p182) target = $region24
      $region23: #{tpu_custom_call.1} parent=5 // pred_region
        // Predicated region
        $region25: #{tpu_custom_call.1} parent=23 // pred_check
          %p185 = pneg %p40
        $region26: #{tpu_custom_call.1} parent=23 // pred_check_branch
          %187 = sbr.rel (%p185) target = $region28
        $region27: #{tpu_custom_call.1} parent=23 // pred_region
          %s188 = sand.u32 %s30, 1
          %s189 = scalar_lea.sflag [#allocation4], %s188
          %s190 = sand.u32 %s30, 1
          %s191 = smul.addr %s190, 16
          %s192 = scalar_lea.vmem [#allocation3], %s191
          %194 = vsyncadd %s189, 0
          %s195 = smul.addr %s20, 2
          %s196 = smul.addr %s195, 8
          %s197 = scalar_lea.hbm %s0, %s196
          %s198 = sshll.u32 %s197, 4
          %s199 = int_to_ptr.hbm [resolvable:$true] %s198
          %s200 = sshll.u32 %s192, 4
          %s201 = int_to_ptr.vmem [resolvable:$true] %s200
          %206 = dma.hbm_to_vmem [thread:$0]  %s199, 256, %s201, %s189, 128, 128, 8
        $region28: #{tpu_custom_call.1} parent=23 // pred_fallthru
          _
        // Predicated region
        $region29: #{tpu_custom_call.1} parent=23 // pred_check
          %p207 = pneg %p108
        $region30: #{tpu_custom_call.1} parent=23 // pred_check_branch
          %209 = sbr.rel (%p207) target = $region32
        $region31: #{tpu_custom_call.1} parent=23 // pred_region
          %s210 = sand.u32 %s98, 1
          %s211 = scalar_lea.sflag [#allocation10], %s210
          %s212 = sand.u32 %s98, 1
          %s213 = smul.addr %s212, 2
          %s214 = scalar_lea.vmem [#allocation9], %s213
          %216 = vsyncadd %s211, 0
          %s217 = smul.addr %s20, 2
          %s218 = scalar_lea.hbm %s3, %s217
          %s220 = sshll.u32 %s218, 4
          %s221 = int_to_ptr.hbm [resolvable:$true] %s220
          %s222 = sshll.u32 %s214, 4
          %s223 = int_to_ptr.vmem [resolvable:$true] %s222
          %225 = dma.hbm_to_vmem [thread:$0]  %s221, 32, %s223, %s211
        $region32: #{tpu_custom_call.1} parent=23 // pred_fallthru
          _
      $region24: #{tpu_custom_call.1} parent=5 // pred_fallthru
        _
      %p226 = scmp.le.s32.totalorder 1, %s20
      %p227 = scmp.lt.s32.totalorder %s20, 7
      %p228 = pnand %p226, %p227
      %p229 = pneg %p228
      // Predicated region
      $region33: #{tpu_custom_call.1} parent=5 // pred_check
        _
      $region34: #{tpu_custom_call.1} parent=5 // pred_check_branch
        %231 = sbr.rel (%p228) target = $region36
      $region35: #{tpu_custom_call.1} parent=5 // pred_region
        %s232 = ssub.s32 %s20, 1
        %s233 = sand.u32 %s33, 1
        %s234 = scalar_lea.sflag [#allocation4], %s233
        %s235 = sand.u32 %s33, 1
        %s236 = smul.addr %s235, 16
        %s237 = scalar_lea.vmem [#allocation3], %s236
        // Predicated region
        $region37: #{tpu_custom_call.1} parent=35 // pred_check
          %p238 = pneg %p46
        $region38: #{tpu_custom_call.1} parent=35 // pred_check_branch
          %240 = sbr.rel (%p238) target = $region40
        $region39: #{tpu_custom_call.1} parent=35 // pred_region
          %242 = dma.done %s234, 256
        $region40: #{tpu_custom_call.1} parent=35 // pred_fallthru
          _
        // Predicated region
        $region41: #{tpu_custom_call.1} parent=35 // pred_check
          %p243 = pneg %p67
        $region42: #{tpu_custom_call.1} parent=35 // pred_check_branch
          %245 = sbr.rel (%p243) target = $region44
        $region43: #{tpu_custom_call.1} parent=35 // pred_region
          %247 = dma.done [#allocation7], 256
        $region44: #{tpu_custom_call.1} parent=35 // pred_fallthru
          _
        // Predicated region
        $region45: #{tpu_custom_call.1} parent=35 // pred_check
          %p248 = pneg %p88
        $region46: #{tpu_custom_call.1} parent=35 // pred_check_branch
          %250 = sbr.rel (%p248) target = $region48
        $region47: #{tpu_custom_call.1} parent=35 // pred_region
          %252 = dma.done [#allocation7], 128
        $region48: #{tpu_custom_call.1} parent=35 // pred_fallthru
          _
        %s253 = sand.u32 %s101, 1
        %s254 = scalar_lea.sflag [#allocation10], %s253
        %s255 = sand.u32 %s101, 1
        %s256 = smul.addr %s255, 2
        %s257 = scalar_lea.vmem [#allocation9], %s256
        // Predicated region
        $region49: #{tpu_custom_call.1} parent=35 // pred_check
          %p258 = pneg %p114
        $region50: #{tpu_custom_call.1} parent=35 // pred_check_branch
          %260 = sbr.rel (%p258) target = $region52
        $region51: #{tpu_custom_call.1} parent=35 // pred_region
          %262 = dma.done %s254, 32
        $region52: #{tpu_custom_call.1} parent=35 // pred_fallthru
          _
        %s263 = sand.u32 %s33, 1
        %s264 = scalar_lea.sflag [#allocation4], %s263
        %s265 = sand.u32 %s33, 1
        %s266 = smul.addr %s265, 16
        %s267 = scalar_lea.vmem [#allocation3], %s266
        %p268 = pneg %p46
        %p269 = pneg %p43
        %p270 = pneg %p67
        %p271 = pneg %p64
        %p272 = pneg %p88
        %p273 = pneg %p85
        %s274 = sand.u32 %s101, 1
        %s275 = scalar_lea.sflag [#allocation10], %s274
        %s276 = sand.u32 %s101, 1
        %s277 = smul.addr %s276, 2
        %s278 = scalar_lea.vmem [#allocation9], %s277
        %p279 = pneg %p114
        %p280 = pneg %p111
        %p281 = pneg %p140
        %p282 = pneg %p137
        %s283 = sand.u32 %s127, 1
        %s284 = scalar_lea.sflag [#allocation5], %s283
        %s285 = sand.u32 %s127, 1
        %s286 = smul.addr %s285, 8
        %s287 = scalar_lea.vmem [#allocation11], %s286
        %v288 = vld [vmem:[#allocation6] sm:$0xff]
        %v289 = vld [vmem:[#allocation6 + $0x8] sm:$0xff]
        %v290 = vld [vmem:[%s237] sm:$0xff]
        %v291 = vld [vmem:[%s237 + $0x8] sm:$0xff]
        %vm292 = vcmask 130048
        %v294 = vsel %vm292, %v290, 0
        %v297 = vsel %vm292, %v291, 0
        %299 = vmatpush.msra.mxu0 0.0
        %300 = vmatpush.msra.mxu0 0.0
        %301 = vmatpush.msra.mxu0 0.0
        %302 = vmatpush.msra.mxu0 0.0
        %303 = vmatpush.msra.mxu0 0.0
        %304 = vmatpush.msra.mxu0 0.0
        %305 = vmatpush.msra.mxu0 0.0
        %306 = vmatpush.msra.mxu0 0.0
        %307 = vmatpush.msra.mxu0 0.0
        %308 = vmatpush.msra.mxu0 0.0
        %309 = vmatpush.msra.mxu0 0.0
        %310 = vmatpush.msra.mxu0 0.0
        %311 = vmatpush.msra.mxu0 0.0
        %312 = vmatpush.msra.mxu0 0.0
        %313 = vmatpush.msra.mxu0 %v289
        %314 = vmatpush.msra.mxu0 %v288
        %315 = vmatmul.f32.gmra.mxu0 %v294
        %v316 = vpop.f32.mrf.mxu0
        %v317 = vadd.f32 0.0, %v316
        %318 = vmatmul.f32.gmra.mxu0 %v297
        %v319 = vpop.f32.mrf.mxu0
        %v320 = vadd.f32 0.0, %v319
        %321 = vdwg.mxu0
        %322 = vst [vmem:[#allocation2] sm:$0xff] %v317
        %323 = vst [vmem:[#allocation2 + $0x8] sm:$0xff] %v320
        %v324 = vld [vmem:[#allocation8] sm:$0xff]
        %v325 = vld [vmem:[#allocation2] sm:$0xff]
        %v326 = vld [vmem:[#allocation2 + $0x8] sm:$0xff]
        %v328 = vsel %vm292, %v324, 0
        %330 = vmatpush.msra.mxu0 0.0
        %331 = vmatpush.msra.mxu0 0.0
        %332 = vmatpush.msra.mxu0 0.0
        %333 = vmatpush.msra.mxu0 0.0
        %334 = vmatpush.msra.mxu0 0.0
        %335 = vmatpush.msra.mxu0 0.0
        %336 = vmatpush.msra.mxu0 0.0
        %337 = vmatpush.msra.mxu0 0.0
        %338 = vmatpush.msra.mxu0 0.0
        %339 = vmatpush.msra.mxu0 0.0
        %340 = vmatpush.msra.mxu0 0.0
        %341 = vmatpush.msra.mxu0 0.0
        %342 = vmatpush.msra.mxu0 0.0
        %343 = vmatpush.msra.mxu0 0.0
        %344 = vmatpush.msra.mxu0 %v326
        %345 = vmatpush.msra.mxu0 %v325
        %346 = vmatmul.f32.gmra.mxu0 %v328
        %v347 = vpop.f32.mrf.mxu0
        %v348 = vadd.f32 0.0, %v347
        %349 = vdwg.mxu0
        %v350 = vld [vmem:[%s257] sm:$0x3]
        %v351 = vperm.slane %v350, 0
        %v352 = vsub.f32 %v348, %v351
        %v353 = vperm.slane %v350, 1
        %v354 = vmul.f32 %v352, %v353
        %355 = vst [vmem:[%s287] sm:$0xff] %v354
        %s356 = sand.u32 %s127, 1
        %s357 = scalar_lea.sflag [#allocation5], %s356
        %s358 = sand.u32 %s127, 1
        %s359 = smul.addr %s358, 8
        %s360 = scalar_lea.vmem [#allocation11], %s359
        // Predicated region
        $region53: #{tpu_custom_call.1} parent=35 // pred_check
          %p361 = pneg %p137
        $region54: #{tpu_custom_call.1} parent=35 // pred_check_branch
          %363 = sbr.rel (%p361) target = $region56
        $region55: #{tpu_custom_call.1} parent=35 // pred_region
          %365 = vsyncadd %s357, 0
          %s366 = smul.addr %s25, 8
          %s367 = scalar_lea.hbm %s4, %s366
          %s369 = sshll.u32 %s360, 4
          %s370 = int_to_ptr.vmem [resolvable:$true] %s369
          %s371 = sshll.u32 %s367, 4
          %s372 = int_to_ptr.hbm [resolvable:$true] %s371
          %374 = dma.vmem_to_hbm [thread:$0]  %s370, 128, %s372, %s357
        $region56: #{tpu_custom_call.1} parent=35 // pred_fallthru
          _
      $region36: #{tpu_custom_call.1} parent=5 // pred_fallthru
        _
      %p375 = scmp.le.s32.totalorder 2, %s20
      // Predicated region
      $region57: #{tpu_custom_call.1} parent=5 // pred_check
        %p376 = pneg %p375
      $region58: #{tpu_custom_call.1} parent=5 // pred_check_branch
        %378 = sbr.rel (%p376) target = $region60
      $region59: #{tpu_custom_call.1} parent=5 // pred_region
        %s379 = ssub.s32 %s20, 2
        // Predicated region
        $region61: #{tpu_custom_call.1} parent=59 // pred_check
          %p380 = pneg %p143
        $region62: #{tpu_custom_call.1} parent=59 // pred_check_branch
          %382 = sbr.rel (%p380) target = $region64
        $region63: #{tpu_custom_call.1} parent=59 // pred_region
          %s383 = sand.u32 %s128, 1
          %s384 = scalar_lea.sflag [#allocation5], %s383
          %s385 = sand.u32 %s128, 1
          %s386 = smul.addr %s385, 8
          %s387 = scalar_lea.vmem [#allocation11], %s386
          %389 = dma.done %s384, 128
        $region64: #{tpu_custom_call.1} parent=59 // pred_fallthru
          _
      $region60: #{tpu_custom_call.1} parent=5 // pred_fallthru
        _
    $region6: #{tpu_custom_call.1} parent=1 // loop_footer
      %s24 = sadd.s32 1, %s20
    $region7: #{tpu_custom_call.1} parent=1 // loop_footer_branch
      %19 = sbr.rel target = $region3
    $region8: #{tpu_custom_call.1} parent=1 // loop_exit
      _
    %390 = vsyncpa [#allocation4], 1
    %s391 = scalar_lea.sflag [#allocation4], 1
    %392 = vsyncpa %s391, 1
    %393 = vsyncpa [#allocation7], 1
    %394 = vsyncpa [#allocation10], 1
    %s395 = scalar_lea.sflag [#allocation10], 1
    %396 = vsyncpa %s395, 1
    %397 = vsyncpa [#allocation5], 1
    %s398 = scalar_lea.sflag [#allocation5], 1
    %399 = vsyncpa %s398, 1

</llo_original>
